<compile_context>
chip_gen: v7x
topology: tpu7x:2x2x1
jax: 0.10.0
libtpu: 0.0.40
codegen_flags: <defaults>
</compile_context>

<pallas_src>
import jax
import jax.numpy as jnp
from jax.experimental import pallas as pl
from jax.experimental.pallas import tpu as pltpu

IN_C = 6          # BatchNorm2d(6) / stem conv in-channels
STEM_C = 32       # stem conv out-channels (feature dim)
KH = KW = 3
STRIDE = 2
PAD = 1
NUM_CLASSES = 10
BN_EPS = 1e-5
LANE = 128        # TPU lane width
NOUT = 2 * LANE   # fused feat(32)+logits(10) output, padded to MXU-native 256
KSPLIT = 2        # K split across two "parallel" grid blocks (v7x dual-core)


# ---------------------------------------------------------------------------
# Pallas kernel: one MXU matmul per K block (BN+conv+pool+FC all pre-folded)
# ---------------------------------------------------------------------------
def _fused_forward_kernel(x_ref, w_ref, b_ref, out_ref):
    # x_ref   : (Bp, Kblk)    batch on sublanes, flattened (cin,h,w) on lanes
    # w_ref   : (Kblk, NOUT)  folded BN*conv*(1/P) weights (+ pre-folded FC)
    # b_ref   : (1, NOUT)     folded biases (feature cols then logit cols)
    # out_ref : (1, Bp, NOUT) partial product for this K block (lane-dense)
    acc = jnp.dot(x_ref[...], w_ref[...], preferred_element_type=jnp.float32)

    @pl.when(pl.program_id(0) == 0)
    def _():
        out_ref[0] = acc + b_ref[...]

    @pl.when(pl.program_id(0) != 0)
    def _():
        out_ref[0] = acc


# ---------------------------------------------------------------------------
# Wrapper: fold BN / conv / pool / FC into one weight slab, then pallas_call
# ---------------------------------------------------------------------------
def _stride_valid_mask(size_in, size_out, ksize):
    """mask[k, r] = 1 iff some output position o reads input index r for kernel
    offset k of a stride-2 / pad-1 conv (r = k + STRIDE*o - PAD)."""
    r = jnp.arange(size_in)[None, :]
    k = jnp.arange(ksize)[:, None]
    t = r + PAD - k
    ok = (t >= 0) & (t % STRIDE == 0) & (t // STRIDE < size_out)
    return ok.astype(jnp.float32)


def fused_forward_pallas(x_nchw, scale, shift, w_conv, w_fc, b_fc):
    B, C, H, W = x_nchw.shape
    Ho = (H + 2 * PAD - KH) // STRIDE + 1
    Wo = (W + 2 * PAD - KW) // STRIDE + 1
    P = Ho * Wo                       # number of conv output positions (pool denom)
    NC = w_fc.shape[0]

    # ---- fold BN (eval), conv, global-average-pool into a linear map on raw x
    rm = _stride_valid_mask(H, Ho, KH)                          # (KH, H)
    cm = _stride_valid_mask(W, Wo, KW)                          # (KW, W)
    # A[i, r, w, o]: contribution of raw x[b, i, r, w] to feature o
    A = jnp.einsum("ar,bw,oiab->irwo", rm, cm, w_conv)
    A = A * (scale / float(P))[:, None, None, None]
    A = A.reshape(C * H * W, STEM_C)                            # (K, 32)
    # BN shift only reaches valid (non-zero-padded) reads of each tap
    cnt = rm.sum(axis=1)[:, None] * cm.sum(axis=1)[None, :]     # (KH, KW)
    feat_bias = jnp.einsum("oiab,i,ab->o", w_conv, shift, cnt) / float(P)
    # Pre-fold the FC so logits come out of the same matmul
    log_w = A @ w_fc.T                                          # (K, NC)
    log_bias = feat_bias @ w_fc.T + b_fc                        # (NC,)

    # ---- lane/sublane-dense padded operands
    K = C * H * W
    Kp = ((K + LANE * KSPLIT - 1) // (LANE * KSPLIT)) * (LANE * KSPLIT)
    Bp = ((B + 7) // 8) * 8                                     # fill sublanes
    Kblk = Kp // KSPLIT

    x_flat = x_nchw.reshape(B, K).astype(jnp.float32)
    x_p = jnp.zeros((Bp, Kp), jnp.float32).at[:B, :K].set(x_flat)
    w_all = (jnp.zeros((Kp, NOUT), jnp.float32)
             .at[:K, :STEM_C].set(A)
             .at[:K, STEM_C:STEM_C + NC].set(log_w))
    b_all = (jnp.zeros((1, NOUT), jnp.float32)
             .at[0, :STEM_C].set(feat_bias)
             .at[0, STEM_C:STEM_C + NC].set(log_bias))

    partials = pl.pallas_call(
        _fused_forward_kernel,
        out_shape=jax.ShapeDtypeStruct((KSPLIT, Bp, NOUT), jnp.float32),
        grid_spec=pltpu.PrefetchScalarGridSpec(
            num_scalar_prefetch=0,
            grid=(KSPLIT,),
            in_specs=[
                pl.BlockSpec((Bp, Kblk), lambda i: (0, i)),
                pl.BlockSpec((Kblk, NOUT), lambda i: (i, 0)),
                pl.BlockSpec((1, NOUT), lambda i: (0, 0)),
            ],
            out_specs=pl.BlockSpec((1, Bp, NOUT), lambda i: (i, 0, 0)),
        ),
        compiler_params=pltpu.CompilerParams(
            dimension_semantics=("parallel",),
            vmem_limit_bytes=32 * 1024 * 1024),
    )(x_p, w_all, b_all)

    out = partials.sum(axis=0)                     # combine the two K partials
    features = out[:B, :STEM_C]
    logits = out[:B, STEM_C:STEM_C + NC]
    return logits, features


# ---------------------------------------------------------------------------
# Model-equivalent forward (eval mode: target=None, dropout = identity)
# ---------------------------------------------------------------------------
def init_params(key):
    ks = jax.random.split(key, 7)
    return {
        "gamma":    jax.random.uniform(ks[0], (IN_C,), jnp.float32, 0.5, 1.5),
        "beta":     0.1 * jax.random.normal(ks[1], (IN_C,), jnp.float32),
        "run_mean": 0.1 * jax.random.normal(ks[2], (IN_C,), jnp.float32),
        "run_var":  jax.random.uniform(ks[3], (IN_C,), jnp.float32, 0.5, 1.5),
        # torch layouts: conv OIHW, linear (out, in)
        "w_conv":   0.1 * jax.random.normal(ks[4], (STEM_C, IN_C, KH, KW), jnp.float32),
        "w_fc":     0.1 * jax.random.normal(ks[5], (NUM_CLASSES, STEM_C), jnp.float32),
        "b_fc":     0.1 * jax.random.normal(ks[6], (NUM_CLASSES,), jnp.float32),
    }


def model_forward(x_nchw, params, return_images=False, return_features=False):
    """Eval-mode forward matching Model.forward(input, feats, target=None)."""
    x = x_nchw.astype(jnp.float32)

    # BatchNorm2d (eval / running stats) folded to per-channel scale & shift;
    # applied via the weight/bias folding inside the fused Pallas kernel.
    scale = params["gamma"] / jnp.sqrt(params["run_var"] + BN_EPS)
    shift = params["beta"] - params["run_mean"] * scale

    logits, features = fused_forward_pallas(
        x, scale, shift, params["w_conv"], params["w_fc"], params["b_fc"])

    out = (logits,)
    if return_images:
        # `images` = BN'd input (NCHW); trivial elementwise op, only when asked.
        images = x * scale[None, :, None, None] + shift[None, :, None, None]
        out = (*out, images)
    if return_features:
        out = (*out, features)
    return out[0] if len(out) == 1 else out


# ---------------------------------------------------------------------------
# Pure-JAX reference (naive BN -> pad -> im2col -> conv -> mean -> fc)
# ---------------------------------------------------------------------------
def extract_stem_patches(x_nhwc):
    """im2col for Conv2d(k=3, stride=2, pad=1): (B,H,W,C) -> (B, Ho*Wo, 9*C)."""
    B, H, W, C = x_nhwc.shape
    Ho = (H + 2 * PAD - KH) // STRIDE + 1
    Wo = (W + 2 * PAD - KW) // STRIDE + 1
    xp = jnp.pad(x_nhwc, ((0, 0), (PAD, PAD), (PAD, PAD), (0, 0)))
    cols = []
    for kh in range(KH):
        for kw in range(KW):
            cols.append(xp[:, kh:kh + STRIDE * Ho:STRIDE,
                            kw:kw + STRIDE * Wo:STRIDE, :])       # (B, Ho, Wo, C)
    patches = jnp.concatenate(cols, axis=-1)                      # order (kh, kw, cin)
    return patches.reshape(B, Ho * Wo, KH * KW * C)


def _reference(x_nchw, params):
    x = jnp.transpose(x_nchw, (0, 2, 3, 1)).astype(jnp.float32)
    scale = params["gamma"] / jnp.sqrt(params["run_var"] + BN_EPS)
    shift = params["beta"] - params["run_mean"] * scale
    x_bn = x * scale + shift
    patches = extract_stem_patches(x_bn)
    w_hwio = jnp.transpose(params["w_conv"], (2, 3, 1, 0)).reshape(KH * KW * IN_C, STEM_C)
    conv = jnp.einsum("bpk,kc->bpc", patches, w_hwio)
    feat = conv.mean(axis=1)
    logits = feat @ params["w_fc"].T + params["b_fc"]
    return logits, feat


if __name__ == "__main__":
    key = jax.random.PRNGKey(0)
    kp, kx = jax.random.split(key)
    params = init_params(kp)

    B, H, W = 2, 16, 16
    x = jax.random.normal(kx, (B, IN_C, H, W), jnp.float32)   # NCHW, like PyTorch

    logits, features = model_forward(x, params, return_features=True)
    jax.block_until_ready(logits)

    assert logits.shape == (B, NUM_CLASSES), logits.shape
    assert features.shape == (B, STEM_C), features.shape

    ref_logits, ref_feat = _reference(x, params)
    assert jnp.allclose(logits, ref_logits, rtol=1e-4, atol=1e-4), "logits mismatch"
    assert jnp.allclose(features, ref_feat, rtol=1e-4, atol=1e-4), "features mismatch"

    print("KERNEL_OK")
</pallas_src>

<mosaic_0001>
module attributes {stable_mosaic.version = 11 : i64} {
  func.func @_fused_forward_kernel(%arg0: i32, %arg1: memref<8x768xf32, #tpu.memory_space<vmem>>, %arg2: memref<768x256xf32, #tpu.memory_space<vmem>>, %arg3: memref<1x256xf32, #tpu.memory_space<vmem>>, %arg4: memref<1x8x256xf32, #tpu.memory_space<vmem>>) attributes {dimension_semantics = [#tpu.dimension_semantics<parallel>], iteration_bounds = array<i64: 2>, scalar_prefetch = 0 : i64, scratch_operands = 0 : i64, tpu.core_type = #tpu.core_type<tc>, window_params = [{transform_indices = @transform_0, window_bounds = array<i64: 8, 768>}, {transform_indices = @transform_1, window_bounds = array<i64: 768, 256>}, {pipeline_mode = #tpu.pipeline_mode<synchronous>, transform_indices = @transform_2, window_bounds = array<i64: 1, 256>}, {transform_indices = @transform_3, window_bounds = array<i64: 1, 8, 256>}]} {
    %c0 = arith.constant 0 : index
    %c0_0 = arith.constant 0 : index
    %0 = vector.load %arg1[%c0, %c0_0] : memref<8x768xf32, #tpu.memory_space<vmem>>, vector<8x768xf32>
    %c0_1 = arith.constant 0 : index
    %c0_2 = arith.constant 0 : index
    %1 = vector.load %arg2[%c0_1, %c0_2] : memref<768x256xf32, #tpu.memory_space<vmem>>, vector<768x256xf32>
    %cst = arith.constant dense<0.000000e+00> : vector<8x256xf32>
    %2 = tpu.matmul %0, %1, %cst {dimension_numbers = #tpu.dot_dimension_numbers<[1], [0], [0], [1], [0, 0, 1, 1], [], []>} : vector<8x768xf32>, vector<768x256xf32>, vector<8x256xf32> -> vector<8x256xf32>
    %c0_i32 = arith.constant 0 : i32
    %3 = arith.cmpi eq, %arg0, %c0_i32 : i32
    %4 = arith.extui %3 : i1 to i32
    %c0_i32_3 = arith.constant 0 : i32
    %5 = arith.cmpi ne, %4, %c0_i32_3 : i32
    scf.if %5 {
      %c0_6 = arith.constant 0 : index
      %c0_7 = arith.constant 0 : index
      %9 = vector.load %arg3[%c0_6, %c0_7] : memref<1x256xf32, #tpu.memory_space<vmem>>, vector<1x256xf32>
      %10 = vector.broadcast %9 : vector<1x256xf32> to vector<8x256xf32>
      %11 = arith.addf %2, %10 : vector<8x256xf32>
      %c0_8 = arith.constant 0 : index
      %c0_9 = arith.constant 0 : index
      %c0_10 = arith.constant 0 : index
      %12 = vector.load %arg4[%c0_8, %c0_9, %c0_10] : memref<1x8x256xf32, #tpu.memory_space<vmem>>, vector<1x8x256xf32>
      %13 = vector.shape_cast %12 : vector<1x8x256xf32> to vector<8x256xf32>
      %14 = vector.shape_cast %11 : vector<8x256xf32> to vector<1x8x256xf32>
      tpu.vector_store %arg4[%c0_8, %c0_9, %c0_10], %14 {strides = array<i32>} : memref<1x8x256xf32, #tpu.memory_space<vmem>>, vector<1x8x256xf32>,
    } else {
    }
    %c0_i32_4 = arith.constant 0 : i32
    %6 = arith.cmpi ne, %arg0, %c0_i32_4 : i32
    %7 = arith.extui %6 : i1 to i32
    %c0_i32_5 = arith.constant 0 : i32
    %8 = arith.cmpi ne, %7, %c0_i32_5 : i32
    scf.if %8 {
      %c0_6 = arith.constant 0 : index
      %c0_7 = arith.constant 0 : index
      %c0_8 = arith.constant 0 : index
      %9 = vector.load %arg4[%c0_6, %c0_7, %c0_8] : memref<1x8x256xf32, #tpu.memory_space<vmem>>, vector<1x8x256xf32>
      %10 = vector.shape_cast %9 : vector<1x8x256xf32> to vector<8x256xf32>
      %11 = vector.shape_cast %2 : vector<8x256xf32> to vector<1x8x256xf32>
      tpu.vector_store %arg4[%c0_6, %c0_7, %c0_8], %11 {strides = array<i32>} : memref<1x8x256xf32, #tpu.memory_space<vmem>>, vector<1x8x256xf32>,
    } else {
    }
    return
  }
  func.func @transform_0(%arg0: i32) -> (i32, i32) {
    %c0_i32 = arith.constant 0 : i32
    %c0_i32_0 = arith.constant 0 : i32
    return %c0_i32, %arg0 : i32, i32
  }
  func.func @transform_1(%arg0: i32) -> (i32, i32) {
    %c0_i32 = arith.constant 0 : i32
    %c0_i32_0 = arith.constant 0 : i32
    return %arg0, %c0_i32 : i32, i32
  }
  func.func @transform_2(%arg0: i32) -> (i32, i32) {
    %c0_i32 = arith.constant 0 : i32
    %c0_i32_0 = arith.constant 0 : i32
    %c0_i32_1 = arith.constant 0 : i32
    return %c0_i32, %c0_i32_0 : i32, i32
  }
  func.func @transform_3(%arg0: i32) -> (i32, i32, i32) {
    %c0_i32 = arith.constant 0 : i32
    %c0_i32_0 = arith.constant 0 : i32
    %c0_i32_1 = arith.constant 0 : i32
    return %arg0, %c0_i32, %c0_i32_0 : i32, i32, i32
  }
}

</mosaic_0001>

<llo_original>
// kernel: tpu_custom_call.1
$region0: #{tpu_custom_call.1}
  #allocation0 [shape = 'u32[]', space=smem, size = 0x4, offset = 0x4, fixed_abs, tag = 'smem constant byte address 0x4 - core index']
  #allocation1 [shape = 'u32[144,128]{1,0:T(1,128)}', space=vmem, size = 0x12000, scoped, tag = 'internal scratch']
  %s0 = inlined_call_operand.hbm [shape: f32[8,1536], index: 0, kind: input, shape index: {}]
  %s1 = inlined_call_operand.hbm [shape: f32[1536,256], index: 1, kind: input, shape index: {}]
  %s2 = inlined_call_operand.hbm [shape: f32[1,256], index: 2, kind: input, shape index: {}]
  %s3 = inlined_call_operand.hbm [shape: f32[2,8,256], index: 3, kind: output, shape index: {}]
  %s4 = sld [smem:[#allocation0]]
  $region65: #{tpu_custom_call.1} parent=0
    _
  %s6 = ssub.s32 1, %s4
  %s7 = scalar_select 0, %s6, %s4
  $region1: #{tpu_custom_call.1} parent=0
    #allocation2 [shape = 'u8[49152]{0}', space=vmem, size = 0xc000, scoped, tag = 'input window, operand 0']
    #allocation3 [shape = 's32[2]{0}', space=sflag, size = 0x8, scoped, tag = 'scoped memory for tpu_custom_call.1']
    #allocation4 [shape = 's32[2]{0}', space=sflag, size = 0x8, scoped, tag = 'scoped memory for tpu_custom_call.1']
    #allocation5 [shape = 'u8[1572864]{0}', space=vmem, size = 0x180000, scoped, tag = 'input window, operand 1']
    #allocation6 [shape = 's32[2]{0}', space=sflag, size = 0x8, scoped, tag = 'scoped memory for tpu_custom_call.1']
    #allocation7 [shape = 'u8[1024]{0}', space=vmem, size = 0x400, scoped, tag = 'input window, operand 2, single buffered']
    #allocation8 [shape = 'u8[16384]{0}', space=vmem, size = 0x4000, scoped, tag = 'output window, operand 0']
    %8 = vsyncpa [#allocation3], 0
    %s9 = scalar_lea.sflag [#allocation3], 1
    %10 = vsyncpa %s9, 0
    %11 = vsyncpa [#allocation6], 0
    %s12 = scalar_lea.sflag [#allocation6], 1
    %13 = vsyncpa %s12, 0
    %14 = vsyncpa [#allocation4], 0
    %s15 = scalar_lea.sflag [#allocation4], 1
    %16 = vsyncpa %s15, 0
    loop: start=0, step=1, limit=4
    $region2: #{tpu_custom_call.1} parent=1 // loop_pre_header
      _
    $region3: #{tpu_custom_call.1} parent=1 // loop_header
      %s18 = sphi 0, %s22
      %p19 = scmp.ge.s32.totalorder %s18, 4
      %s28 = sphi 0, %s30
      %s31 = sphi 0, %s28
      %s32 = sphi 0, %s31
      %s48 = sphi 0, %s32
      %s54 = sphi 0, %s56
      %s57 = sphi 0, %s54
      %s58 = sphi 0, %s57
      %s74 = sphi 0, %s58
      %s78 = sphi 0, %s78
      %s80 = sphi 0, %s78
      %s81 = sphi 0, %s80
      %s95 = sphi 0, %s81
      %s101 = sphi 0, %s103
      %s104 = sphi 0, %s101
      %s105 = sphi 0, %s104
      %s121 = sphi 0, %s105
    $region4: #{tpu_custom_call.1} parent=1 // loop_header_branch
      %21 = sbr.rel (%p19) target = $region8
    $region5: #{tpu_custom_call.1} parent=1 // loop_body
      %s23 = ssub.s32 %s18, 1
      %s24 = ssub.s32 %s18, 2
      %s25 = sadd.s32 %s18, 1
      %s26 = ssub.s32 %s18, %s25
      %p27 = scmp.eq.s32.totalorder %s26, 0
      %s29 = sadd.s32 %s28, 1
      %s30 = scalar_select %p27, %s28, %s29
      %p33 = pneg %p27
      %p34 = scmp.eq.s32.totalorder %s18, 1
      %p35 = por %p33, %p34
      %p36 = scmp.ne.s32.totalorder %s28, %s31
      %p37 = scmp.eq.s32.totalorder %s18, 0
      %p38 = por %p36, %p37
      %p39 = scmp.ne.s32.totalorder %s28, %s31
      %p40 = scmp.eq.s32.totalorder %s23, 1
      %p41 = por %p39, %p40
      %p42 = scmp.ne.s32.totalorder %s31, %s32
      %p43 = scmp.eq.s32.totalorder %s23, 0
      %p44 = por %p42, %p43
      %p45 = scmp.ne.s32.totalorder %s31, %s32
      %p46 = scmp.eq.s32.totalorder %s24, 1
      %p47 = por %p45, %p46
      %p49 = scmp.ne.s32.totalorder %s32, %s48
      %p50 = scmp.eq.s32.totalorder %s24, 0
      %p51 = por %p49, %p50
      %s52 = ssub.s32 %s18, %s25
      %p53 = scmp.eq.s32.totalorder %s52, 0
      %s55 = sadd.s32 %s54, 1
      %s56 = scalar_select %p53, %s54, %s55
      %p59 = pneg %p53
      %p60 = scmp.eq.s32.totalorder %s18, 1
      %p61 = por %p59, %p60
      %p62 = scmp.ne.s32.totalorder %s54, %s57
      %p63 = scmp.eq.s32.totalorder %s18, 0
      %p64 = por %p62, %p63
      %p65 = scmp.ne.s32.totalorder %s54, %s57
      %p66 = scmp.eq.s32.totalorder %s23, 1
      %p67 = por %p65, %p66
      %p68 = scmp.ne.s32.totalorder %s57, %s58
      %p69 = scmp.eq.s32.totalorder %s23, 0
      %p70 = por %p68, %p69
      %p71 = scmp.ne.s32.totalorder %s57, %s58
      %p72 = scmp.eq.s32.totalorder %s24, 1
      %p73 = por %p71, %p72
      %p75 = scmp.ne.s32.totalorder %s58, %s74
      %p76 = scmp.eq.s32.totalorder %s24, 0
      %p77 = por %p75, %p76
      %s79 = sadd.s32 %s78, 1
      %p82 = scmp.eq.s32.totalorder %s18, 1
      %p83 = scmp.ne.s32.totalorder %s78, %s80
      %p84 = scmp.eq.s32.totalorder %s18, 0
      %p85 = por %p83, %p84
      %p86 = scmp.ne.s32.totalorder %s78, %s80
      %p87 = scmp.eq.s32.totalorder %s23, 1
      %p88 = por %p86, %p87
      %p89 = scmp.ne.s32.totalorder %s80, %s81
      %p90 = scmp.eq.s32.totalorder %s23, 0
      %p91 = por %p89, %p90
      %p92 = scmp.ne.s32.totalorder %s80, %s81
      %p93 = scmp.eq.s32.totalorder %s24, 1
      %p94 = por %p92, %p93
      %p96 = scmp.ne.s32.totalorder %s81, %s95
      %p97 = scmp.eq.s32.totalorder %s24, 0
      %p98 = por %p96, %p97
      %s99 = ssub.s32 %s18, %s25
      %p100 = scmp.eq.s32.totalorder %s99, 0
      %s102 = sadd.s32 %s101, 1
      %s103 = scalar_select %p100, %s101, %s102
      %p106 = pneg %p100
      %p107 = scmp.eq.s32.totalorder %s18, 1
      %p108 = por %p106, %p107
      %p109 = scmp.ne.s32.totalorder %s101, %s104
      %p110 = scmp.eq.s32.totalorder %s18, 0
      %p111 = por %p109, %p110
      %p112 = scmp.ne.s32.totalorder %s101, %s104
      %p113 = scmp.eq.s32.totalorder %s23, 1
      %p114 = por %p112, %p113
      %p115 = scmp.ne.s32.totalorder %s104, %s105
      %p116 = scmp.eq.s32.totalorder %s23, 0
      %p117 = por %p115, %p116
      %p118 = scmp.ne.s32.totalorder %s104, %s105
      %p119 = scmp.eq.s32.totalorder %s24, 1
      %p120 = por %p118, %p119
      %p122 = scmp.ne.s32.totalorder %s105, %s121
      %p123 = scmp.eq.s32.totalorder %s24, 0
      %p124 = por %p122, %p123
      %p125 = scmp.le.s32.totalorder 1, %s18
      %p126 = scmp.lt.s32.totalorder %s18, 3
      %p127 = pnand %p125, %p126
      %p128 = pneg %p127
      // Predicated region
      $region9: #{tpu_custom_call.1} parent=5 // pred_check
        _
      $region10: #{tpu_custom_call.1} parent=5 // pred_check_branch
        %130 = sbr.rel (%p127) target = $region12
      $region11: #{tpu_custom_call.1} parent=5 // pred_region
        %s131 = ssub.s32 %s18, 1
        // Predicated region
        $region13: #{tpu_custom_call.1} parent=11 // pred_check
          %p132 = pneg %p91
        $region14: #{tpu_custom_call.1} parent=11 // pred_check_branch
          %134 = sbr.rel (%p132) target = $region16
        $region15: #{tpu_custom_call.1} parent=11 // pred_region
          %s136 = ssub.s32 32, 32
          %137 = vsyncadd [#allocation6], %s136
          %s139 = sshll.u32 [#allocation7], 4
          %s140 = int_to_ptr.vmem [resolvable:$true] %s139
          %142 = dma.hbm_to_vmem [thread:$0]  %s2, 32, %s140, [#allocation6]
        $region16: #{tpu_custom_call.1} parent=11 // pred_fallthru
          _
      $region12: #{tpu_custom_call.1} parent=5 // pred_fallthru
        _
      %p143 = scmp.lt.s32.totalorder %s18, 2
      // Predicated region
      $region17: #{tpu_custom_call.1} parent=5 // pred_check
        %p144 = pneg %p143
      $region18: #{tpu_custom_call.1} parent=5 // pred_check_branch
        %146 = sbr.rel (%p144) target = $region20
      $region19: #{tpu_custom_call.1} parent=5 // pred_region
        // Predicated region
        $region21: #{tpu_custom_call.1} parent=19 // pred_check
          %p147 = pneg %p38
        $region22: #{tpu_custom_call.1} parent=19 // pred_check_branch
          %149 = sbr.rel (%p147) target = $region24
        $region23: #{tpu_custom_call.1} parent=19 // pred_region
          %s150 = sand.u32 %s28, 1
          %s151 = scalar_lea.sflag [#allocation3], %s150
          %s152 = sand.u32 %s28, 1
          %s153 = smul.addr %s152, 48
          %s154 = scalar_lea.vmem [#allocation2], %s153
          %s155 = smul.u32 6, %s18
          %s157 = ssub.s32 768, 768
          %158 = vsyncadd %s151, %s157
          %s159 = smul.addr %s155, 128
          %s160 = scalar_lea.hbm %s0, %s159
          %s162 = sshll.u32 %s154, 4
          %s163 = int_to_ptr.vmem [resolvable:$true] %s162
          %165 = dma.hbm_to_vmem [thread:$0]  %s160, 768, %s163, %s151
        $region24: #{tpu_custom_call.1} parent=19 // pred_fallthru
          _
        // Predicated region
        $region25: #{tpu_custom_call.1} parent=19 // pred_check
          %p166 = pneg %p64
        $region26: #{tpu_custom_call.1} parent=19 // pred_check_branch
          %168 = sbr.rel (%p166) target = $region28
        $region27: #{tpu_custom_call.1} parent=19 // pred_region
          %s169 = sand.u32 %s18, 1
          %s170 = scalar_lea.sflag [#allocation6], %s169
          %s171 = sand.u32 %s54, 1
          %s172 = smul.addr %s171, 1536
          %s173 = scalar_lea.vmem [#allocation5], %s172
          %s174 = smul.u32 96, %s18
          %s176 = ssub.s32 24576, 24576
          %177 = vsyncadd %s170, %s176
          %s178 = smul.addr %s174, 2
          %s179 = smul.addr %s178, 128
          %s180 = scalar_lea.hbm %s1, %s179
          %s181 = sshll.u32 %s173, 4
          %s182 = int_to_ptr.vmem [resolvable:$true] %s181
          %187 = dma.hbm_to_vmem [thread:$0]  %s180, 24576, %s182, %s170, 256, 256, 16
        $region28: #{tpu_custom_call.1} parent=19 // pred_fallthru
          _
      $region20: #{tpu_custom_call.1} parent=5 // pred_fallthru
        _
      %p188 = scmp.le.s32.totalorder 1, %s18
      %p189 = scmp.lt.s32.totalorder %s18, 3
      %p190 = pnand %p188, %p189
      %p191 = pneg %p190
      // Predicated region
      $region29: #{tpu_custom_call.1} parent=5 // pred_check
        _
      $region30: #{tpu_custom_call.1} parent=5 // pred_check_branch
        %193 = sbr.rel (%p190) target = $region32
      $region31: #{tpu_custom_call.1} parent=5 // pred_region
        %s194 = ssub.s32 %s18, 1
        %s195 = sand.u32 %s31, 1
        %s196 = scalar_lea.sflag [#allocation3], %s195
        %s197 = sand.u32 %s31, 1
        %s198 = smul.addr %s197, 48
        %s199 = scalar_lea.vmem [#allocation2], %s198
        // Predicated region
        $region33: #{tpu_custom_call.1} parent=31 // pred_check
          %p200 = pneg %p44
        $region34: #{tpu_custom_call.1} parent=31 // pred_check_branch
          %202 = sbr.rel (%p200) target = $region36
        $region35: #{tpu_custom_call.1} parent=31 // pred_region
          %203 = dma.done %s196, 768
        $region36: #{tpu_custom_call.1} parent=31 // pred_fallthru
          _
        %s204 = sand.u32 %s23, 1
        %s205 = scalar_lea.sflag [#allocation6], %s204
        %s206 = sand.u32 %s57, 1
        %s207 = smul.addr %s206, 1536
        %s208 = scalar_lea.vmem [#allocation5], %s207
        // Predicated region
        $region37: #{tpu_custom_call.1} parent=31 // pred_check
          %p209 = pneg %p70
        $region38: #{tpu_custom_call.1} parent=31 // pred_check_branch
          %211 = sbr.rel (%p209) target = $region40
        $region39: #{tpu_custom_call.1} parent=31 // pred_region
          %212 = dma.done %s205, 24576
        $region40: #{tpu_custom_call.1} parent=31 // pred_fallthru
          _
        // Predicated region
        $region41: #{tpu_custom_call.1} parent=31 // pred_check
          %p213 = pneg %p91
        $region42: #{tpu_custom_call.1} parent=31 // pred_check_branch
          %215 = sbr.rel (%p213) target = $region44
        $region43: #{tpu_custom_call.1} parent=31 // pred_region
          %216 = dma.done [#allocation6], 32
        $region44: #{tpu_custom_call.1} parent=31 // pred_fallthru
          _
        %s217 = sand.u32 %s31, 1
        %s218 = scalar_lea.sflag [#allocation3], %s217
        %s219 = sand.u32 %s31, 1
        %s220 = smul.addr %s219, 48
        %s221 = scalar_lea.vmem [#allocation2], %s220
        %p222 = pneg %p44
        %p223 = pneg %p41
        %s224 = sand.u32 %s23, 1
        %s225 = scalar_lea.sflag [#allocation6], %s224
        %s226 = sand.u32 %s57, 1
        %s227 = smul.addr %s226, 1536
        %s228 = scalar_lea.vmem [#allocation5], %s227
        %p229 = pneg %p70
        %p230 = pneg %p67
        %p231 = pneg %p91
        %p232 = pneg %p88
        %p233 = pneg %p117
        %p234 = pneg %p114
        %s235 = sand.u32 %s104, 1
        %s236 = scalar_lea.sflag [#allocation4], %s235
        %s237 = sand.u32 %s104, 1
        %s238 = smul.addr %s237, 16
        %s239 = scalar_lea.vmem [#allocation8], %s238
        %s240 = smul.u32 6, %s23
        %s241 = smul.u32 96, %s23
        %v242 = vld [vmem:[%s199] sm:$0xff]
        %v243 = vld [vmem:[%s199 + $0x8] sm:$0xff]
        %v244 = vld [vmem:[%s199 + $0x10] sm:$0xff]
        %v245 = vld [vmem:[%s199 + $0x18] sm:$0xff]
        %v246 = vld [vmem:[%s199 + $0x20] sm:$0xff]
        %v247 = vld [vmem:[%s199 + $0x28] sm:$0xff]
        %v248 = vld [vmem:[%s208] sm:$0xff]
        %v249 = vld [vmem:[%s208 + $0x8] sm:$0xff]
        %v250 = vld [vmem:[%s208 + $0x10] sm:$0xff]
        %v251 = vld [vmem:[%s208 + $0x18] sm:$0xff]
        %v252 = vld [vmem:[%s208 + $0x20] sm:$0xff]
        %v253 = vld [vmem:[%s208 + $0x28] sm:$0xff]
        %v254 = vld [vmem:[%s208 + $0x30] sm:$0xff]
        %v255 = vld [vmem:[%s208 + $0x38] sm:$0xff]
        %v256 = vld [vmem:[%s208 + $0x40] sm:$0xff]
        %v257 = vld [vmem:[%s208 + $0x48] sm:$0xff]
        %v258 = vld [vmem:[%s208 + $0x50] sm:$0xff]
        %v259 = vld [vmem:[%s208 + $0x58] sm:$0xff]
        %v260 = vld [vmem:[%s208 + $0x60] sm:$0xff]
        %v261 = vld [vmem:[%s208 + $0x68] sm:$0xff]
        %v262 = vld [vmem:[%s208 + $0x70] sm:$0xff]
        %v263 = vld [vmem:[%s208 + $0x78] sm:$0xff]
        %v264 = vld [vmem:[%s208 + $0x80] sm:$0xff]
        %v265 = vld [vmem:[%s208 + $0x88] sm:$0xff]
        %v266 = vld [vmem:[%s208 + $0x90] sm:$0xff]
        %v267 = vld [vmem:[%s208 + $0x98] sm:$0xff]
        %v268 = vld [vmem:[%s208 + $0xa0] sm:$0xff]
        %v269 = vld [vmem:[%s208 + $0xa8] sm:$0xff]
        %v270 = vld [vmem:[%s208 + $0xb0] sm:$0xff]
        %v271 = vld [vmem:[%s208 + $0xb8] sm:$0xff]
        %v272 = vld [vmem:[%s208 + $0xc0] sm:$0xff]
        %v273 = vld [vmem:[%s208 + $0xc8] sm:$0xff]
        %v274 = vld [vmem:[%s208 + $0xd0] sm:$0xff]
        %v275 = vld [vmem:[%s208 + $0xd8] sm:$0xff]
        %v276 = vld [vmem:[%s208 + $0xe0] sm:$0xff]
        %v277 = vld [vmem:[%s208 + $0xe8] sm:$0xff]
        %v278 = vld [vmem:[%s208 + $0xf0] sm:$0xff]
        %v279 = vld [vmem:[%s208 + $0xf8] sm:$0xff]
        %v280 = vld [vmem:[%s208 + $0x100] sm:$0xff]
        %v281 = vld [vmem:[%s208 + $0x108] sm:$0xff]
        %v282 = vld [vmem:[%s208 + $0x110] sm:$0xff]
        %v283 = vld [vmem:[%s208 + $0x118] sm:$0xff]
        %v284 = vld [vmem:[%s208 + $0x120] sm:$0xff]
        %v285 = vld [vmem:[%s208 + $0x128] sm:$0xff]
        %v286 = vld [vmem:[%s208 + $0x130] sm:$0xff]
        %v287 = vld [vmem:[%s208 + $0x138] sm:$0xff]
        %v288 = vld [vmem:[%s208 + $0x140] sm:$0xff]
        %v289 = vld [vmem:[%s208 + $0x148] sm:$0xff]
        %v290 = vld [vmem:[%s208 + $0x150] sm:$0xff]
        %v291 = vld [vmem:[%s208 + $0x158] sm:$0xff]
        %v292 = vld [vmem:[%s208 + $0x160] sm:$0xff]
        %v293 = vld [vmem:[%s208 + $0x168] sm:$0xff]
        %v294 = vld [vmem:[%s208 + $0x170] sm:$0xff]
        %v295 = vld [vmem:[%s208 + $0x178] sm:$0xff]
        %v296 = vld [vmem:[%s208 + $0x180] sm:$0xff]
        %v297 = vld [vmem:[%s208 + $0x188] sm:$0xff]
        %v298 = vld [vmem:[%s208 + $0x190] sm:$0xff]
        %v299 = vld [vmem:[%s208 + $0x198] sm:$0xff]
        %v300 = vld [vmem:[%s208 + $0x1a0] sm:$0xff]
        %v301 = vld [vmem:[%s208 + $0x1a8] sm:$0xff]
        %v302 = vld [vmem:[%s208 + $0x1b0] sm:$0xff]
        %v303 = vld [vmem:[%s208 + $0x1b8] sm:$0xff]
        %v304 = vld [vmem:[%s208 + $0x1c0] sm:$0xff]
        %v305 = vld [vmem:[%s208 + $0x1c8] sm:$0xff]
        %v306 = vld [vmem:[%s208 + $0x1d0] sm:$0xff]
        %v307 = vld [vmem:[%s208 + $0x1d8] sm:$0xff]
        %v308 = vld [vmem:[%s208 + $0x1e0] sm:$0xff]
        %v309 = vld [vmem:[%s208 + $0x1e8] sm:$0xff]
        %v310 = vld [vmem:[%s208 + $0x1f0] sm:$0xff]
        %v311 = vld [vmem:[%s208 + $0x1f8] sm:$0xff]
        %v312 = vld [vmem:[%s208 + $0x200] sm:$0xff]
        %v313 = vld [vmem:[%s208 + $0x208] sm:$0xff]
        %v314 = vld [vmem:[%s208 + $0x210] sm:$0xff]
        %v315 = vld [vmem:[%s208 + $0x218] sm:$0xff]
        %v316 = vld [vmem:[%s208 + $0x220] sm:$0xff]
        %v317 = vld [vmem:[%s208 + $0x228] sm:$0xff]
        %v318 = vld [vmem:[%s208 + $0x230] sm:$0xff]
        %v319 = vld [vmem:[%s208 + $0x238] sm:$0xff]
        %v320 = vld [vmem:[%s208 + $0x240] sm:$0xff]
        %v321 = vld [vmem:[%s208 + $0x248] sm:$0xff]
        %v322 = vld [vmem:[%s208 + $0x250] sm:$0xff]
        %v323 = vld [vmem:[%s208 + $0x258] sm:$0xff]
        %v324 = vld [vmem:[%s208 + $0x260] sm:$0xff]
        %v325 = vld [vmem:[%s208 + $0x268] sm:$0xff]
        %v326 = vld [vmem:[%s208 + $0x270] sm:$0xff]
        %v327 = vld [vmem:[%s208 + $0x278] sm:$0xff]
        %v328 = vld [vmem:[%s208 + $0x280] sm:$0xff]
        %v329 = vld [vmem:[%s208 + $0x288] sm:$0xff]
        %v330 = vld [vmem:[%s208 + $0x290] sm:$0xff]
        %v331 = vld [vmem:[%s208 + $0x298] sm:$0xff]
        %v332 = vld [vmem:[%s208 + $0x2a0] sm:$0xff]
        %v333 = vld [vmem:[%s208 + $0x2a8] sm:$0xff]
        %v334 = vld [vmem:[%s208 + $0x2b0] sm:$0xff]
        %v335 = vld [vmem:[%s208 + $0x2b8] sm:$0xff]
        %v336 = vld [vmem:[%s208 + $0x2c0] sm:$0xff]
        %v337 = vld [vmem:[%s208 + $0x2c8] sm:$0xff]
        %v338 = vld [vmem:[%s208 + $0x2d0] sm:$0xff]
        %v339 = vld [vmem:[%s208 + $0x2d8] sm:$0xff]
        %v340 = vld [vmem:[%s208 + $0x2e0] sm:$0xff]
        %v341 = vld [vmem:[%s208 + $0x2e8] sm:$0xff]
        %v342 = vld [vmem:[%s208 + $0x2f0] sm:$0xff]
        %v343 = vld [vmem:[%s208 + $0x2f8] sm:$0xff]
        %v344 = vld [vmem:[%s208 + $0x300] sm:$0xff]
        %v345 = vld [vmem:[%s208 + $0x308] sm:$0xff]
        %v346 = vld [vmem:[%s208 + $0x310] sm:$0xff]
        %v347 = vld [vmem:[%s208 + $0x318] sm:$0xff]
        %v348 = vld [vmem:[%s208 + $0x320] sm:$0xff]
        %v349 = vld [vmem:[%s208 + $0x328] sm:$0xff]
        %v350 = vld [vmem:[%s208 + $0x330] sm:$0xff]
        %v351 = vld [vmem:[%s208 + $0x338] sm:$0xff]
        %v352 = vld [vmem:[%s208 + $0x340] sm:$0xff]
        %v353 = vld [vmem:[%s208 + $0x348] sm:$0xff]
        %v354 = vld [vmem:[%s208 + $0x350] sm:$0xff]
        %v355 = vld [vmem:[%s208 + $0x358] sm:$0xff]
        %v356 = vld [vmem:[%s208 + $0x360] sm:$0xff]
        %v357 = vld [vmem:[%s208 + $0x368] sm:$0xff]
        %v358 = vld [vmem:[%s208 + $0x370] sm:$0xff]
        %v359 = vld [vmem:[%s208 + $0x378] sm:$0xff]
        %v360 = vld [vmem:[%s208 + $0x380] sm:$0xff]
        %v361 = vld [vmem:[%s208 + $0x388] sm:$0xff]
        %v362 = vld [vmem:[%s208 + $0x390] sm:$0xff]
        %v363 = vld [vmem:[%s208 + $0x398] sm:$0xff]
        %v364 = vld [vmem:[%s208 + $0x3a0] sm:$0xff]
        %v365 = vld [vmem:[%s208 + $0x3a8] sm:$0xff]
        %v366 = vld [vmem:[%s208 + $0x3b0] sm:$0xff]
        %v367 = vld [vmem:[%s208 + $0x3b8] sm:$0xff]
        %v368 = vld [vmem:[%s208 + $0x3c0] sm:$0xff]
        %v369 = vld [vmem:[%s208 + $0x3c8] sm:$0xff]
        %v370 = vld [vmem:[%s208 + $0x3d0] sm:$0xff]
        %v371 = vld [vmem:[%s208 + $0x3d8] sm:$0xff]
        %v372 = vld [vmem:[%s208 + $0x3e0] sm:$0xff]
        %v373 = vld [vmem:[%s208 + $0x3e8] sm:$0xff]
        %v374 = vld [vmem:[%s208 + $0x3f0] sm:$0xff]
        %v375 = vld [vmem:[%s208 + $0x3f8] sm:$0xff]
        %v376 = vld [vmem:[%s208 + $0x400] sm:$0xff]
        %v377 = vld [vmem:[%s208 + $0x408] sm:$0xff]
        %v378 = vld [vmem:[%s208 + $0x410] sm:$0xff]
        %v379 = vld [vmem:[%s208 + $0x418] sm:$0xff]
        %v380 = vld [vmem:[%s208 + $0x420] sm:$0xff]
        %v381 = vld [vmem:[%s208 + $0x428] sm:$0xff]
        %v382 = vld [vmem:[%s208 + $0x430] sm:$0xff]
        %v383 = vld [vmem:[%s208 + $0x438] sm:$0xff]
        %v384 = vld [vmem:[%s208 + $0x440] sm:$0xff]
        %v385 = vld [vmem:[%s208 + $0x448] sm:$0xff]
        %v386 = vld [vmem:[%s208 + $0x450] sm:$0xff]
        %v387 = vld [vmem:[%s208 + $0x458] sm:$0xff]
        %v388 = vld [vmem:[%s208 + $0x460] sm:$0xff]
        %v389 = vld [vmem:[%s208 + $0x468] sm:$0xff]
        %v390 = vld [vmem:[%s208 + $0x470] sm:$0xff]
        %v391 = vld [vmem:[%s208 + $0x478] sm:$0xff]
        %v392 = vld [vmem:[%s208 + $0x480] sm:$0xff]
        %v393 = vld [vmem:[%s208 + $0x488] sm:$0xff]
        %v394 = vld [vmem:[%s208 + $0x490] sm:$0xff]
        %v395 = vld [vmem:[%s208 + $0x498] sm:$0xff]
        %v396 = vld [vmem:[%s208 + $0x4a0] sm:$0xff]
        %v397 = vld [vmem:[%s208 + $0x4a8] sm:$0xff]
        %v398 = vld [vmem:[%s208 + $0x4b0] sm:$0xff]
        %v399 = vld [vmem:[%s208 + $0x4b8] sm:$0xff]
        %v400 = vld [vmem:[%s208 + $0x4c0] sm:$0xff]
        %v401 = vld [vmem:[%s208 + $0x4c8] sm:$0xff]
        %v402 = vld [vmem:[%s208 + $0x4d0] sm:$0xff]
        %v403 = vld [vmem:[%s208 + $0x4d8] sm:$0xff]
        %v404 = vld [vmem:[%s208 + $0x4e0] sm:$0xff]
        %v405 = vld [vmem:[%s208 + $0x4e8] sm:$0xff]
        %v406 = vld [vmem:[%s208 + $0x4f0] sm:$0xff]
        %v407 = vld [vmem:[%s208 + $0x4f8] sm:$0xff]
        %v408 = vld [vmem:[%s208 + $0x500] sm:$0xff]
        %v409 = vld [vmem:[%s208 + $0x508] sm:$0xff]
        %v410 = vld [vmem:[%s208 + $0x510] sm:$0xff]
        %v411 = vld [vmem:[%s208 + $0x518] sm:$0xff]
        %v412 = vld [vmem:[%s208 + $0x520] sm:$0xff]
        %v413 = vld [vmem:[%s208 + $0x528] sm:$0xff]
        %v414 = vld [vmem:[%s208 + $0x530] sm:$0xff]
        %v415 = vld [vmem:[%s208 + $0x538] sm:$0xff]
        %v416 = vld [vmem:[%s208 + $0x540] sm:$0xff]
        %v417 = vld [vmem:[%s208 + $0x548] sm:$0xff]
        %v418 = vld [vmem:[%s208 + $0x550] sm:$0xff]
        %v419 = vld [vmem:[%s208 + $0x558] sm:$0xff]
        %v420 = vld [vmem:[%s208 + $0x560] sm:$0xff]
        %v421 = vld [vmem:[%s208 + $0x568] sm:$0xff]
        %v422 = vld [vmem:[%s208 + $0x570] sm:$0xff]
        %v423 = vld [vmem:[%s208 + $0x578] sm:$0xff]
        %v424 = vld [vmem:[%s208 + $0x580] sm:$0xff]
        %v425 = vld [vmem:[%s208 + $0x588] sm:$0xff]
        %v426 = vld [vmem:[%s208 + $0x590] sm:$0xff]
        %v427 = vld [vmem:[%s208 + $0x598] sm:$0xff]
        %v428 = vld [vmem:[%s208 + $0x5a0] sm:$0xff]
        %v429 = vld [vmem:[%s208 + $0x5a8] sm:$0xff]
        %v430 = vld [vmem:[%s208 + $0x5b0] sm:$0xff]
        %v431 = vld [vmem:[%s208 + $0x5b8] sm:$0xff]
        %v432 = vld [vmem:[%s208 + $0x5c0] sm:$0xff]
        %v433 = vld [vmem:[%s208 + $0x5c8] sm:$0xff]
        %v434 = vld [vmem:[%s208 + $0x5d0] sm:$0xff]
        %v435 = vld [vmem:[%s208 + $0x5d8] sm:$0xff]
        %v436 = vld [vmem:[%s208 + $0x5e0] sm:$0xff]
        %v437 = vld [vmem:[%s208 + $0x5e8] sm:$0xff]
        %v438 = vld [vmem:[%s208 + $0x5f0] sm:$0xff]
        %v439 = vld [vmem:[%s208 + $0x5f8] sm:$0xff]
        %440 = vmatprep.subr.mxu0 %v249
        %441 = vmatpush1.msra.mxu0 %v248
        %442 = vmatprep.subr.mxu0 %v251
        %443 = vmatpush1.msra.mxu0 %v250
        %444 = vmatprep.subr.mxu0 %v253
        %445 = vmatpush1.msra.mxu0 %v252
        %446 = vmatprep.subr.mxu0 %v255
        %447 = vmatpush1.msra.mxu0 %v254
        %448 = vmatprep.subr.mxu0 %v257
        %449 = vmatpush1.msra.mxu0 %v256
        %450 = vmatprep.subr.mxu0 %v259
        %451 = vmatpush1.msra.mxu0 %v258
        %452 = vmatprep.subr.mxu0 %v261
        %453 = vmatpush1.msra.mxu0 %v260
        %454 = vmatprep.subr.mxu0 %v263
        %455 = vmatpush1.msra.mxu0 %v262
        %456 = vmatprep.subr.mxu0 %v265
        %457 = vmatpush1.msra.mxu0 %v264
        %458 = vmatprep.subr.mxu0 %v267
        %459 = vmatpush1.msra.mxu0 %v266
        %460 = vmatprep.subr.mxu0 %v269
        %461 = vmatpush1.msra.mxu0 %v268
        %462 = vmatprep.subr.mxu0 %v271
        %463 = vmatpush1.msra.mxu0 %v270
        %464 = vmatprep.subr.mxu0 %v273
        %465 = vmatpush1.msra.mxu0 %v272
        %466 = vmatprep.subr.mxu0 %v275
        %467 = vmatpush1.msra.mxu0 %v274
        %468 = vmatprep.subr.mxu0 %v277
        %469 = vmatpush1.msra.mxu0 %v276
        %470 = vmatprep.subr.mxu0 %v279
        %471 = vmatpush1.msra.mxu0 %v278
        %472 = vmatprep.subr.mxu0 %v281
        %473 = vmatpush1.msra.mxu0 %v280
        %474 = vmatprep.subr.mxu0 %v283
        %475 = vmatpush1.msra.mxu0 %v282
        %476 = vmatprep.subr.mxu0 %v285
        %477 = vmatpush1.msra.mxu0 %v284
        %478 = vmatprep.subr.mxu0 %v287
        %479 = vmatpush1.msra.mxu0 %v286
        %480 = vmatprep.subr.mxu0 %v289
        %481 = vmatpush1.msra.mxu0 %v288
        %482 = vmatprep.subr.mxu0 %v291
        %483 = vmatpush1.msra.mxu0 %v290
        %484 = vmatprep.subr.mxu0 %v293
        %485 = vmatpush1.msra.mxu0 %v292
        %486 = vmatprep.subr.mxu0 %v295
        %487 = vmatpush1.msra.mxu0 %v294
        %488 = vmatprep.subr.mxu0 %v297
        %489 = vmatpush1.msra.mxu0 %v296
        %490 = vmatprep.subr.mxu0 %v299
        %491 = vmatpush1.msra.mxu0 %v298
        %492 = vmatprep.subr.mxu0 %v301
        %493 = vmatpush1.msra.mxu0 %v300
        %494 = vmatprep.subr.mxu0 %v303
        %495 = vmatpush1.msra.mxu0 %v302
        %496 = vmatprep.subr.mxu0 %v305
        %497 = vmatpush1.msra.mxu0 %v304
        %498 = vmatprep.subr.mxu0 %v307
        %499 = vmatpush1.msra.mxu0 %v306
        %500 = vmatprep.subr.mxu0 %v309
        %501 = vmatpush1.msra.mxu0 %v308
        %502 = vmatprep.subr.mxu0 %v311
        %503 = vmatpush1.msra.mxu0 %v310
        %504 = vmatprep.mubr.f32.mxu0 %v243
        %505 = vmatmul.mubr.f32.gmra.mrb[0].mxu0 %v242
        %v506 = vpop.f32.mrb[0].mxu0
        %v507 = vadd.f32 0.0, %v506
        %v508 = vpop.f32.mrb[0].mxu0
        %v509 = vadd.f32 0.0, %v508
        %510 = vdwg.mxu0
        %511 = vmatprep.subr.mxu0 %v313
        %512 = vmatpush1.msra.mxu0 %v312
        %513 = vmatprep.subr.mxu0 %v315
        %514 = vmatpush1.msra.mxu0 %v314
        %515 = vmatprep.subr.mxu0 %v317
        %516 = vmatpush1.msra.mxu0 %v316
        %517 = vmatprep.subr.mxu0 %v319
        %518 = vmatpush1.msra.mxu0 %v318
        %519 = vmatprep.subr.mxu0 %v321
        %520 = vmatpush1.msra.mxu0 %v320
        %521 = vmatprep.subr.mxu0 %v323
        %522 = vmatpush1.msra.mxu0 %v322
        %523 = vmatprep.subr.mxu0 %v325
        %524 = vmatpush1.msra.mxu0 %v324
        %525 = vmatprep.subr.mxu0 %v327
        %526 = vmatpush1.msra.mxu0 %v326
        %527 = vmatprep.subr.mxu0 %v329
        %528 = vmatpush1.msra.mxu0 %v328
        %529 = vmatprep.subr.mxu0 %v331
        %530 = vmatpush1.msra.mxu0 %v330
        %531 = vmatprep.subr.mxu0 %v333
        %532 = vmatpush1.msra.mxu0 %v332
        %533 = vmatprep.subr.mxu0 %v335
        %534 = vmatpush1.msra.mxu0 %v334
        %535 = vmatprep.subr.mxu0 %v337
        %536 = vmatpush1.msra.mxu0 %v336
        %537 = vmatprep.subr.mxu0 %v339
        %538 = vmatpush1.msra.mxu0 %v338
        %539 = vmatprep.subr.mxu0 %v341
        %540 = vmatpush1.msra.mxu0 %v340
        %541 = vmatprep.subr.mxu0 %v343
        %542 = vmatpush1.msra.mxu0 %v342
        %543 = vmatprep.subr.mxu0 %v345
        %544 = vmatpush1.msra.mxu0 %v344
        %545 = vmatprep.subr.mxu0 %v347
        %546 = vmatpush1.msra.mxu0 %v346
        %547 = vmatprep.subr.mxu0 %v349
        %548 = vmatpush1.msra.mxu0 %v348
        %549 = vmatprep.subr.mxu0 %v351
        %550 = vmatpush1.msra.mxu0 %v350
        %551 = vmatprep.subr.mxu0 %v353
        %552 = vmatpush1.msra.mxu0 %v352
        %553 = vmatprep.subr.mxu0 %v355
        %554 = vmatpush1.msra.mxu0 %v354
        %555 = vmatprep.subr.mxu0 %v357
        %556 = vmatpush1.msra.mxu0 %v356
        %557 = vmatprep.subr.mxu0 %v359
        %558 = vmatpush1.msra.mxu0 %v358
        %559 = vmatprep.subr.mxu0 %v361
        %560 = vmatpush1.msra.mxu0 %v360
        %561 = vmatprep.subr.mxu0 %v363
        %562 = vmatpush1.msra.mxu0 %v362
        %563 = vmatprep.subr.mxu0 %v365
        %564 = vmatpush1.msra.mxu0 %v364
        %565 = vmatprep.subr.mxu0 %v367
        %566 = vmatpush1.msra.mxu0 %v366
        %567 = vmatprep.subr.mxu0 %v369
        %568 = vmatpush1.msra.mxu0 %v368
        %569 = vmatprep.subr.mxu0 %v371
        %570 = vmatpush1.msra.mxu0 %v370
        %571 = vmatprep.subr.mxu0 %v373
        %572 = vmatpush1.msra.mxu0 %v372
        %573 = vmatprep.subr.mxu0 %v375
        %574 = vmatpush1.msra.mxu0 %v374
        %575 = vmatprep.mubr.f32.mxu0 %v245
        %576 = vmatmul.mubr.f32.gmra.mrb[0].mxu0 %v244
        %v577 = vpop.f32.mrb[0].mxu0
        %v578 = vadd.f32 %v507, %v577
        %v579 = vpop.f32.mrb[0].mxu0
        %v580 = vadd.f32 %v509, %v579
        %581 = vdwg.mxu0
        %582 = vmatprep.subr.mxu0 %v377
        %583 = vmatpush1.msra.mxu0 %v376
        %584 = vmatprep.subr.mxu0 %v379
        %585 = vmatpush1.msra.mxu0 %v378
        %586 = vmatprep.subr.mxu0 %v381
        %587 = vmatpush1.msra.mxu0 %v380
        %588 = vmatprep.subr.mxu0 %v383
        %589 = vmatpush1.msra.mxu0 %v382
        %590 = vmatprep.subr.mxu0 %v385
        %591 = vmatpush1.msra.mxu0 %v384
        %592 = vmatprep.subr.mxu0 %v387
        %593 = vmatpush1.msra.mxu0 %v386
        %594 = vmatprep.subr.mxu0 %v389
        %595 = vmatpush1.msra.mxu0 %v388
        %596 = vmatprep.subr.mxu0 %v391
        %597 = vmatpush1.msra.mxu0 %v390
        %598 = vmatprep.subr.mxu0 %v393
        %599 = vmatpush1.msra.mxu0 %v392
        %600 = vmatprep.subr.mxu0 %v395
        %601 = vmatpush1.msra.mxu0 %v394
        %602 = vmatprep.subr.mxu0 %v397
        %603 = vmatpush1.msra.mxu0 %v396
        %604 = vmatprep.subr.mxu0 %v399
        %605 = vmatpush1.msra.mxu0 %v398
        %606 = vmatprep.subr.mxu0 %v401
        %607 = vmatpush1.msra.mxu0 %v400
        %608 = vmatprep.subr.mxu0 %v403
        %609 = vmatpush1.msra.mxu0 %v402
        %610 = vmatprep.subr.mxu0 %v405
        %611 = vmatpush1.msra.mxu0 %v404
        %612 = vmatprep.subr.mxu0 %v407
        %613 = vmatpush1.msra.mxu0 %v406
        %614 = vmatprep.subr.mxu0 %v409
        %615 = vmatpush1.msra.mxu0 %v408
        %616 = vmatprep.subr.mxu0 %v411
        %617 = vmatpush1.msra.mxu0 %v410
        %618 = vmatprep.subr.mxu0 %v413
        %619 = vmatpush1.msra.mxu0 %v412
        %620 = vmatprep.subr.mxu0 %v415
        %621 = vmatpush1.msra.mxu0 %v414
        %622 = vmatprep.subr.mxu0 %v417
        %623 = vmatpush1.msra.mxu0 %v416
        %624 = vmatprep.subr.mxu0 %v419
        %625 = vmatpush1.msra.mxu0 %v418
        %626 = vmatprep.subr.mxu0 %v421
        %627 = vmatpush1.msra.mxu0 %v420
        %628 = vmatprep.subr.mxu0 %v423
        %629 = vmatpush1.msra.mxu0 %v422
        %630 = vmatprep.subr.mxu0 %v425
        %631 = vmatpush1.msra.mxu0 %v424
        %632 = vmatprep.subr.mxu0 %v427
        %633 = vmatpush1.msra.mxu0 %v426
        %634 = vmatprep.subr.mxu0 %v429
        %635 = vmatpush1.msra.mxu0 %v428
        %636 = vmatprep.subr.mxu0 %v431
        %637 = vmatpush1.msra.mxu0 %v430
        %638 = vmatprep.subr.mxu0 %v433
        %639 = vmatpush1.msra.mxu0 %v432
        %640 = vmatprep.subr.mxu0 %v435
        %641 = vmatpush1.msra.mxu0 %v434
        %642 = vmatprep.subr.mxu0 %v437
        %643 = vmatpush1.msra.mxu0 %v436
        %644 = vmatprep.subr.mxu0 %v439
        %645 = vmatpush1.msra.mxu0 %v438
        %646 = vmatprep.mubr.f32.mxu0 %v247
        %647 = vmatmul.mubr.f32.gmra.mrb[0].mxu0 %v246
        %v648 = vpop.f32.mrb[0].mxu0
        %v649 = vadd.f32 %v578, %v648
        %v650 = vpop.f32.mrb[0].mxu0
        %v651 = vadd.f32 %v580, %v650
        %652 = vdwg.mxu0
        %p653 = scmp.eq.s32.totalorder %s23, 0
        // Predicated region
        $region45: #{tpu_custom_call.1} parent=31 // pred_check
          %p654 = pneg %p653
        $region46: #{tpu_custom_call.1} parent=31 // pred_check_branch
          %656 = sbr.rel (%p654) target = $region48
        $region47: #{tpu_custom_call.1} parent=31 // pred_region
          %v657 = vld [vmem:[#allocation7] sm:$0x3]
          %v659 = vlaneseq
          %v660 = vshrl.u32 %v659, 7
          %v661 = vsub.s32 0, %v660
          %v662 = vrot.slane %v657, %v661
          %v663 = vlaneseq
          %v664 = vshrl.u32 %v663, 7
          %v665 = vsub.s32 1, %v664
          %v666 = vrot.slane %v657, %v665
          %v669 = vadd.f32 %v649, %v662
          %v670 = vadd.f32 %v651, %v666
          %671 = vst [vmem:[%s239] sm:$0xff] %v669
          %672 = vst [vmem:[%s239 + $0x8] sm:$0xff] %v670
        $region48: #{tpu_custom_call.1} parent=31 // pred_fallthru
          _
        %p673 = scmp.ne.s32.totalorder %s23, 0
        // Predicated region
        $region49: #{tpu_custom_call.1} parent=31 // pred_check
          %p674 = pneg %p673
        $region50: #{tpu_custom_call.1} parent=31 // pred_check_branch
          %676 = sbr.rel (%p674) target = $region52
        $region51: #{tpu_custom_call.1} parent=31 // pred_region
          %677 = vst [vmem:[%s239] sm:$0xff] %v649
          %678 = vst [vmem:[%s239 + $0x8] sm:$0xff] %v651
        $region52: #{tpu_custom_call.1} parent=31 // pred_fallthru
          _
        %s679 = sand.u32 %s104, 1
        %s680 = scalar_lea.sflag [#allocation4], %s679
        %s681 = sand.u32 %s104, 1
        %s682 = smul.addr %s681, 16
        %s683 = scalar_lea.vmem [#allocation8], %s682
        // Predicated region
        $region53: #{tpu_custom_call.1} parent=31 // pred_check
          %p684 = pneg %p114
        $region54: #{tpu_custom_call.1} parent=31 // pred_check_branch
          %686 = sbr.rel (%p684) target = $region56
        $region55: #{tpu_custom_call.1} parent=31 // pred_region
          %s688 = ssub.s32 256, 256
          %689 = vsyncadd %s680, %s688
          %s690 = smul.addr %s23, 2
          %s691 = smul.addr %s690, 128
          %s692 = scalar_lea.hbm %s3, %s691
          %s694 = sshll.u32 %s683, 4
          %s695 = int_to_ptr.vmem [resolvable:$true] %s694
          %697 = dma.vmem_to_hbm [thread:$0]  %s695, 256, %s692, %s680
        $region56: #{tpu_custom_call.1} parent=31 // pred_fallthru
          _
      $region32: #{tpu_custom_call.1} parent=5 // pred_fallthru
        _
      %p698 = scmp.le.s32.totalorder 2, %s18
      // Predicated region
      $region57: #{tpu_custom_call.1} parent=5 // pred_check
        %p699 = pneg %p698
      $region58: #{tpu_custom_call.1} parent=5 // pred_check_branch
        %701 = sbr.rel (%p699) target = $region60
      $region59: #{tpu_custom_call.1} parent=5 // pred_region
        %s702 = ssub.s32 %s18, 2
        // Predicated region
        $region61: #{tpu_custom_call.1} parent=59 // pred_check
          %p703 = pneg %p120
        $region62: #{tpu_custom_call.1} parent=59 // pred_check_branch
          %705 = sbr.rel (%p703) target = $region64
        $region63: #{tpu_custom_call.1} parent=59 // pred_region
          %s706 = sand.u32 %s105, 1
          %s707 = scalar_lea.sflag [#allocation4], %s706
          %s708 = sand.u32 %s105, 1
          %s709 = smul.addr %s708, 16
          %s710 = scalar_lea.vmem [#allocation8], %s709
          %711 = dma.done %s707, 256
        $region64: #{tpu_custom_call.1} parent=59 // pred_fallthru
          _
      $region60: #{tpu_custom_call.1} parent=5 // pred_fallthru
        _
    $region6: #{tpu_custom_call.1} parent=1 // loop_footer
      %s22 = sadd.s32 1, %s18
    $region7: #{tpu_custom_call.1} parent=1 // loop_footer_branch
      %17 = sbr.rel target = $region3
    $region8: #{tpu_custom_call.1} parent=1 // loop_exit
      _
    %712 = vsyncpa [#allocation3], 1
    %s713 = scalar_lea.sflag [#allocation3], 1
    %714 = vsyncpa %s713, 1
    %715 = vsyncpa [#allocation6], 1
    %s716 = scalar_lea.sflag [#allocation6], 1
    %717 = vsyncpa %s716, 1
    %718 = vsyncpa [#allocation4], 1
    %s719 = scalar_lea.sflag [#allocation4], 1
    %720 = vsyncpa %s719, 1

</llo_original>
